<compile_context>
chip_gen: v7x
topology: tpu7x:2x2x1
jax: 0.10.0
libtpu: 0.0.40
codegen_flags: <defaults>
</compile_context>

<pallas_src>
import functools

import jax
import jax.numpy as jnp
from jax import lax
from jax.experimental import pallas as pl
from jax.experimental.pallas import tpu as pltpu


def _pair(v):
    return (v, v) if isinstance(v, int) else tuple(v)


def _round_up(x, m):
    return ((x + m - 1) // m) * m


def _glu_deconv_kernel(p_ref, w_ref, b_ref, o_ref):
    """Fused single-GEMM GLU on one lane-dense M tile.

    p_ref: (1, K, tm)       bf16  transposed patch tile (shared across phases)
    w_ref: (2*Cg, K)        bf16  fused [value-phases ; gate-phases] weight rows
    b_ref: (2*Cg, 1)        f32   fused bias
    o_ref: (1, Cg, tm)            out * sigmoid(gate), Cg = G * Npad (Npad % 8 == 0)
    """
    half = o_ref.shape[1]                       # sublane-aligned split (multiple of 8)
    z = jnp.dot(w_ref[...], p_ref[0],
                preferred_element_type=jnp.float32) + b_ref[...]
    o_ref[0] = (z[:half] * jax.nn.sigmoid(z[half:])).astype(o_ref.dtype)


def _fused_weight_rows(w, pH, pW, sH, sW, dminH, dminW, DH, DW, n_pad):
    """(C_in, C_out, kH, kW) ConvTranspose2d weight -> (G*n_pad, DH*DW*C_in) rows.

    Row g*n_pad + co holds the sub-kernel of output phase g = phiH*sW + phiW for
    channel co.  K ordering is (tH, tW, c_in), matching the patch matrix; the kernel
    tap for window offset t is kh = phi + p - s*(dmin + t) (taps outside [0, k) are
    zero — the price of sharing one patch window across all phases).
    """
    c_in, c_out, kH, kW = w.shape
    G = sH * sW
    rows = jnp.zeros((G, n_pad, DH, DW, c_in), w.dtype)
    for phH in range(sH):
        for phW in range(sW):
            g = phH * sW + phW
            for tH in range(DH):
                khH = phH + pH - sH * (dminH + tH)
                if not 0 <= khH < kH:
                    continue
                for tW in range(DW):
                    khW = phW + pW - sW * (dminW + tW)
                    if not 0 <= khW < kW:
                        continue
                    rows = rows.at[g, :c_out, tH, tW, :].set(w[:, :, khH, khW].T)
    return rows.reshape(G * n_pad, DH * DW * c_in)


@functools.partial(jax.jit, static_argnames=("stride", "padding", "output_padding",
                                             "tile_m", "out_dtype"))
def glu_conv_transpose2d(x, w1, b1, w2, b2, stride, padding=0,
                         output_padding=(0, 0), *, tile_m=1024,
                         out_dtype=jnp.float32):
    """x: (B, C_in, H_in, W_in) float32 NCHW. Returns (B, C_out, H_out, W_out)."""
    sH, sW = _pair(stride)
    pH, pW = _pair(padding)
    opH, opW = _pair(output_padding)
    c_in, c_out, kH, kW = w1.shape
    B, _, H, W = x.shape
    if pH > kH - 1 or pW > kW - 1:
        raise ValueError("padding larger than kernel_size-1 is not supported")
    if not (opH < sH and opW < sW):
        raise ValueError("output_padding must be smaller than stride")
    if b1 is None:
        b1 = jnp.zeros((c_out,), jnp.float32)
    if b2 is None:
        b2 = jnp.zeros((c_out,), jnp.float32)

    Ho = (H - 1) * sH - 2 * pH + kH + opH
    Wo = (W - 1) * sW - 2 * pW + kW + opW

    # --- sub-pixel decomposition geometry (per spatial dim) ----------------------
    # Output row ho = phi + s*oh reads x[oh + d] for d in [dmin, dmax], with kernel
    # tap kh = phi + p - s*d.  Window is the union over phases (same for all).
    dminH, dmaxH = -((kH - 1 - pH) // sH), (sH - 1 + pH) // sH
    dminW, dmaxW = -((kW - 1 - pW) // sW), (sW - 1 + pW) // sW
    DH, DW = dmaxH - dminH + 1, dmaxW - dminW + 1
    Hc, Wc = -(-Ho // sH), -(-Wo // sW)          # common per-phase output grid
    G = sH * sW

    # --- common patch matrix on the original-resolution input (bf16, cast early) --
    x_bf = x.astype(jnp.bfloat16)
    LH, RH = -dminH, max(0, Hc + dmaxH - H)
    LW, RW = -dminW, max(0, Wc + dmaxW - W)
    x_pad = jnp.pad(x_bf, ((0, 0), (0, 0), (LH, RH), (LW, RW)))
    taps = [x_pad[:, :, tH:tH + Hc, tW:tW + Wc]
            for tH in range(DH) for tW in range(DW)]      # each (B, C_in, Hc, Wc)
    K = DH * DW * c_in
    Mb = Hc * Wc
    patches = jnp.stack(taps, axis=1).reshape(B, K, Mb)

    # --- balanced tiling of the lane (M) axis ------------------------------------
    Mb128 = _round_up(Mb, 128)
    n_tiles = pl.cdiv(Mb128, max(tile_m, 128))
    tm = _round_up(pl.cdiv(Mb128, n_tiles), 128)          # equal tiles, 128-aligned
    Mb_pad = n_tiles * tm                                  # waste < 128 lanes / tile
    if Mb_pad != Mb:
        patches = jnp.pad(patches, ((0, 0), (0, 0), (0, Mb_pad - Mb)))

    # --- fused weights / bias: [all value phases | all gate phases] rows ----------
    n_pad = _round_up(c_out, 8)                            # sublane-aligned GLU split
    Cg = G * n_pad
    w_fused = jnp.concatenate(
        [_fused_weight_rows(w1, pH, pW, sH, sW, dminH, dminW, DH, DW, n_pad),
         _fused_weight_rows(w2, pH, pW, sH, sW, dminH, dminW, DH, DW, n_pad)],
        axis=0).astype(jnp.bfloat16)                       # (2*Cg, K)

    def _pad_bias(b):
        return jnp.tile(jnp.pad(b.astype(jnp.float32), (0, n_pad - c_out)), G)
    b_fused = jnp.concatenate([_pad_bias(b1), _pad_bias(b2)]).reshape(2 * Cg, 1)

    # --- VMEM budget (double-buffered streamed tiles + resident weights x2) -------
    out_isz = jnp.dtype(out_dtype).itemsize
    vmem_bytes = (2 * (K * tm * 2)                 # bf16 patch tile, double-buffered
                  + 2 * (Cg * tm * out_isz)        # output tile, double-buffered
                  + 2 * (2 * Cg * K * 2 + 2 * Cg * 4))   # weight+bias (x2: megacore)
    vmem_limit = int(min(max(2 * vmem_bytes + (4 << 20), 32 << 20), 64 << 20))

    # --- grid: larger parallel axis first (v7x dual-TC load balance) --------------
    if n_tiles >= B:
        grid = (n_tiles, B)
        xmap = lambda i, b: (b, 0, i)
    else:
        grid = (B, n_tiles)
        xmap = lambda b, i: (b, 0, i)
    cmap = lambda *_: (0, 0)

    out = pl.pallas_call(
        _glu_deconv_kernel,
        out_shape=jax.ShapeDtypeStruct((B, Cg, Mb_pad), out_dtype),
        grid_spec=pltpu.PrefetchScalarGridSpec(
            num_scalar_prefetch=0,
            grid=grid,
            in_specs=[
                pl.BlockSpec((1, K, tm), xmap),            # streamed patch tile
                pl.BlockSpec((2 * Cg, K), cmap),           # resident fused weight
                pl.BlockSpec((2 * Cg, 1), cmap),           # resident fused bias
            ],
            out_specs=pl.BlockSpec((1, Cg, tm), xmap),
        ),
        compiler_params=pltpu.CompilerParams(
            dimension_semantics=("parallel", "parallel"),
            vmem_limit_bytes=vmem_limit),
    )(patches, w_fused, b_fused)

    # --- phase de-interleave (pixel shuffle) + crop --------------------------------
    y = out[:, :, :Mb].reshape(B, sH, sW, n_pad, Hc, Wc)
    y = jnp.transpose(y, (0, 3, 4, 1, 5, 2)).reshape(B, n_pad, Hc * sH, Wc * sW)
    return y[:, :c_out, :Ho, :Wo]


def _reference(x, w1, b1, w2, b2, stride, padding, output_padding):
    """Pure-JAX/XLA reference with PyTorch ConvTranspose2d semantics (f32)."""
    sH, sW = _pair(stride)
    pH, pW = _pair(padding)
    opH, opW = _pair(output_padding)

    def deconv(w, b):
        _, _, kH, kW = w.shape
        wf = jnp.transpose(jnp.flip(w, (2, 3)), (1, 0, 2, 3))  # OIHW
        y = lax.conv_general_dilated(
            x, wf, window_strides=(1, 1),
            padding=[(kH - 1 - pH, kH - 1 - pH + opH),
                     (kW - 1 - pW, kW - 1 - pW + opW)],
            lhs_dilation=(sH, sW),
            dimension_numbers=("NCHW", "OIHW", "NCHW"))
        return y + b[None, :, None, None]

    return deconv(w1, b1) * jax.nn.sigmoid(deconv(w2, b2))


if __name__ == "__main__":
    # module hyperparameters
    B, C_in, C_out = 2, 4, 4
    H_in = W_in = 16
    kernel_size = (3, 3)
    stride = (2, 2)
    padding = (1, 1)
    output_padding = (1, 1)

    key = jax.random.PRNGKey(0)
    kx, kw1, kb1, kw2, kb2 = jax.random.split(key, 5)
    x = jax.random.normal(kx, (B, C_in, H_in, W_in), jnp.float32)
    w1 = 0.1 * jax.random.normal(kw1, (C_in, C_out, *kernel_size), jnp.float32)
    b1 = 0.1 * jax.random.normal(kb1, (C_out,), jnp.float32)
    w2 = 0.1 * jax.random.normal(kw2, (C_in, C_out, *kernel_size), jnp.float32)
    b2 = 0.1 * jax.random.normal(kb2, (C_out,), jnp.float32)

    y = glu_conv_transpose2d(x, w1, b1, w2, b2, stride=stride, padding=padding,
                             output_padding=output_padding)
    y = jax.block_until_ready(y)

    y_ref = _reference(x, w1, b1, w2, b2, stride, padding, output_padding)
    H_out = (H_in - 1) * stride[0] - 2 * padding[0] + kernel_size[0] + output_padding[0]
    W_out = (W_in - 1) * stride[1] - 2 * padding[1] + kernel_size[1] + output_padding[1]
    assert y.shape == (B, C_out, H_out, W_out)
    # bf16 MXU inputs with f32 accumulation -> relaxed tolerance vs the f32 reference.
    assert jnp.allclose(y, y_ref, atol=3e-2, rtol=3e-2)

    print("KERNEL_OK")
</pallas_src>

<mosaic_0001>
module attributes {stable_mosaic.version = 11 : i64} {
  func.func @_glu_deconv_kernel(%arg0: i32, %arg1: i32, %arg2: memref<1x16x256xbf16, #tpu.memory_space<vmem>>, %arg3: memref<64x16xbf16, #tpu.memory_space<vmem>>, %arg4: memref<64x1xf32, #tpu.memory_space<vmem>>, %arg5: memref<1x32x256xf32, #tpu.memory_space<vmem>>) attributes {dimension_semantics = [#tpu.dimension_semantics<parallel>, #tpu.dimension_semantics<parallel>], iteration_bounds = array<i64: 2, 1>, scalar_prefetch = 0 : i64, scratch_operands = 0 : i64, tpu.core_type = #tpu.core_type<tc>, window_params = [{transform_indices = @transform_0, window_bounds = array<i64: 1, 16, 256>}, {pipeline_mode = #tpu.pipeline_mode<synchronous>, transform_indices = @transform_1, window_bounds = array<i64: 64, 16>}, {pipeline_mode = #tpu.pipeline_mode<synchronous>, transform_indices = @transform_2, window_bounds = array<i64: 64, 1>}, {transform_indices = @transform_3, window_bounds = array<i64: 1, 32, 256>}]} {
    %c0 = arith.constant 0 : index
    %c0_0 = arith.constant 0 : index
    %0 = vector.load %arg3[%c0, %c0_0] : memref<64x16xbf16, #tpu.memory_space<vmem>>, vector<64x16xbf16>
    %c0_1 = arith.constant 0 : index
    %c0_2 = arith.constant 0 : index
    %c0_3 = arith.constant 0 : index
    %1 = vector.load %arg2[%c0_1, %c0_2, %c0_3] : memref<1x16x256xbf16, #tpu.memory_space<vmem>>, vector<1x16x256xbf16>
    %2 = vector.shape_cast %1 : vector<1x16x256xbf16> to vector<16x256xbf16>
    %cst = arith.constant dense<0.000000e+00> : vector<64x256xf32>
    %3 = tpu.matmul %0, %2, %cst {dimension_numbers = #tpu.dot_dimension_numbers<[1], [0], [0], [1], [0, 0, 1, 1], [], []>} : vector<64x16xbf16>, vector<16x256xbf16>, vector<64x256xf32> -> vector<64x256xf32>
    %c0_4 = arith.constant 0 : index
    %c0_5 = arith.constant 0 : index
    %4 = vector.load %arg4[%c0_4, %c0_5] : memref<64x1xf32, #tpu.memory_space<vmem>>, vector<64x1xf32>
    %5 = vector.broadcast %4 : vector<64x1xf32> to vector<64x256xf32>
    %6 = arith.addf %3, %5 : vector<64x256xf32>
    %7 = vector.extract_strided_slice %6 {offsets = [0, 0], sizes = [32, 256], strides = [1, 1]} : vector<64x256xf32> to vector<32x256xf32>
    %8 = vector.extract_strided_slice %6 {offsets = [32, 0], sizes = [32, 256], strides = [1, 1]} : vector<64x256xf32> to vector<32x256xf32>
    %9 = arith.negf %8 : vector<32x256xf32>
    %10 = math.exp %9 : vector<32x256xf32>
    %cst_6 = arith.constant 1.000000e+00 : f32
    %11 = vector.broadcast %cst_6 : f32 to vector<32x256xf32>
    %12 = arith.addf %11, %10 : vector<32x256xf32>
    %13 = arith.divf %11, %12 : vector<32x256xf32>
    %14 = arith.mulf %7, %13 : vector<32x256xf32>
    %c0_7 = arith.constant 0 : index
    %c0_8 = arith.constant 0 : index
    %c0_9 = arith.constant 0 : index
    %15 = vector.load %arg5[%c0_7, %c0_8, %c0_9] : memref<1x32x256xf32, #tpu.memory_space<vmem>>, vector<1x32x256xf32>
    %16 = vector.shape_cast %15 : vector<1x32x256xf32> to vector<32x256xf32>
    %17 = vector.shape_cast %14 : vector<32x256xf32> to vector<1x32x256xf32>
    tpu.vector_store %arg5[%c0_7, %c0_8, %c0_9], %17 {strides = array<i32>} : memref<1x32x256xf32, #tpu.memory_space<vmem>>, vector<1x32x256xf32>,
    return
  }
  func.func @transform_0(%arg0: i32, %arg1: i32) -> (i32, i32, i32) {
    %c0_i32 = arith.constant 0 : i32
    %c0_i32_0 = arith.constant 0 : i32
    return %arg0, %c0_i32, %arg1 : i32, i32, i32
  }
  func.func @transform_1(%arg0: i32, %arg1: i32) -> (i32, i32) {
    %c0_i32 = arith.constant 0 : i32
    %c0_i32_0 = arith.constant 0 : i32
    %c0_i32_1 = arith.constant 0 : i32
    return %c0_i32, %c0_i32_0 : i32, i32
  }
  func.func @transform_2(%arg0: i32, %arg1: i32) -> (i32, i32) {
    %c0_i32 = arith.constant 0 : i32
    %c0_i32_0 = arith.constant 0 : i32
    %c0_i32_1 = arith.constant 0 : i32
    return %c0_i32, %c0_i32_0 : i32, i32
  }
  func.func @transform_3(%arg0: i32, %arg1: i32) -> (i32, i32, i32) {
    %c0_i32 = arith.constant 0 : i32
    %c0_i32_0 = arith.constant 0 : i32
    return %arg0, %c0_i32, %arg1 : i32, i32, i32
  }
}

</mosaic_0001>

<llo_original>
// kernel: tile.18
$region0: #{tile.18}
  #allocation0 [shape = 's32[1]{0}', space=sflag, size = 0x4, scoped, tag = 'scoped memory for tile.18']
  %s0 = inlined_call_operand.vmem [shape: f32[8], index: 0, kind: input, shape index: {}]
  %s1 = inlined_call_operand.vmem [shape: f32[4,8], index: 1, kind: output, shape index: {}]
  // Predicated region
  $region2: #{tile.18} parent=0 // pred_check
    _
  $region3: #{tile.18} parent=0 // pred_check_branch
    %3 = sbr.rel (0) target = $region5
  $region4: #{tile.18} parent=0 // pred_region
    _
  $region5: #{tile.18} parent=0 // pred_fallthru
    _
  %v4 = vld [vmem:[%s0] ss:$0 sm:$0xff]
  %5 = vst [vmem:[%s1] sm:$0xf] %v4

// kernel: tile.19
$region0: #{tile.19}
  %s0 = inlined_call_operand.vmem [shape: f32[4,8], index: 0, kind: input, shape index: {}]
  %s1 = inlined_call_operand.vmem [shape: f32[32], index: 1, kind: output, shape index: {}]
  $region1: #{tile.19} parent=0
    #allocation0 [shape = 'u8[4096]{0}', space=vmem, size = 0x1000, scoped, tag = 'scoped mem for output reshape']
    #allocation1 [shape = 'u8[4096]{0}', space=vmem, size = 0x1000, scoped, tag = 'scoped mem for input reshape']
    %s3 = sshllo.u32 0, 4
    %v4 = vld [vmem:[%s0] sm:%s3]
    %5 = vst [vmem:[#allocation1] sm:%s3] %v4
    %v6 = vld [vmem:[#allocation1] sm:$0x1]
    %vm7 = vcmask 64512
    %8 = vst.msk [vmem:[#allocation0] sm:$0x1] %vm7, %v6
    %s9 = scalar_lea.vmem [#allocation1], 3
    %v10 = vld [vmem:[%s9] sm:$0x1]
    %11 = vrot.lane.b32.xlu0 %v10, 24
    %v12 = vpop.permute.xlu0 %11
    %vm13 = vcmask 261312
    %14 = vst.msk [vmem:[#allocation0] sm:$0x1] %vm13, %v12
    %s15 = scalar_lea.vmem [#allocation1], 2
    %v16 = vld [vmem:[%s15] sm:$0x1]
    %17 = vrot.lane.b32.xlu0 %v16, 16
    %v18 = vpop.permute.xlu0 %17
    %vm19 = vcmask 195712
    %20 = vst.msk [vmem:[#allocation0] sm:$0x1] %vm19, %v18
    %s21 = scalar_lea.vmem [#allocation1], 1
    %v22 = vld [vmem:[%s21] sm:$0x1]
    %23 = vrot.lane.b32.xlu0 %v22, 8
    %v24 = vpop.permute.xlu0 %23
    %vm25 = vcmask 130112
    %26 = vst.msk [vmem:[#allocation0] sm:$0x1] %vm25, %v24
    %s28 = sshllo.u32 0, 1
    %v30 = vld [vmem:[#allocation0] sm:%s28]
    %s31 = sshllo.u32 0, 1
    %32 = vst [vmem:[%s1] sm:%s31] %v30

// kernel: glu_conv_transpose2d.1
$region0: #{glu_conv_transpose2d.1}
  #allocation0 [shape = 'u32[]', space=smem, size = 0x4, offset = 0x4, fixed_abs, tag = 'smem constant byte address 0x4 - core index']
  #allocation1 [shape = 'u32[144,128]{1,0:T(1,128)}', space=vmem, size = 0x12000, scoped, tag = 'internal scratch']
  %s0 = inlined_call_operand.vmem [shape: bf16[2,16,256], index: 0, kind: input, shape index: {}]
  %s1 = inlined_call_operand.vmem [shape: bf16[64,16], index: 1, kind: input, shape index: {}]
  %s2 = inlined_call_operand.vmem [shape: f32[64,1], index: 2, kind: input, shape index: {}]
  %s3 = inlined_call_operand.vmem [shape: f32[2,32,256], index: 3, kind: output, shape index: {}]
  %s4 = sld [smem:[#allocation0]]
  $region45: #{glu_conv_transpose2d.1} parent=0
    _
  %s6 = ssub.s32 1, %s4
  %s7 = scalar_select 0, %s6, %s4
  loop: start=0, step=1, limit=4
  $region2: #{glu_conv_transpose2d.1} parent=0 // loop_pre_header
    _
  $region3: #{glu_conv_transpose2d.1} parent=0 // loop_header
    %s9 = sphi 0, %s13
    %p10 = scmp.ge.s32.totalorder %s9, 4
    %s16 = sphi 0, %s28
    %s17 = sphi 0, %s24
    %s18 = sphi 0, %s16
    %s19 = sphi 0, %s17
    %s20 = sphi 0, %s18
    %s21 = sphi 0, %s19
    %s33 = sphi 0, %s35
    %s36 = sphi 0, %s33
    %s37 = sphi 0, %s36
    %s53 = sphi 0, %s37
    %s57 = sphi 0, %s57
    %s59 = sphi 0, %s57
    %s60 = sphi 0, %s59
    %s74 = sphi 0, %s60
    %s78 = sphi 0, %s78
    %s80 = sphi 0, %s78
    %s81 = sphi 0, %s80
    %s95 = sphi 0, %s81
    %s103 = sphi 0, %s105
    %s106 = sphi 0, %s103
    %s107 = sphi 0, %s106
    %s123 = sphi 0, %s107
  $region4: #{glu_conv_transpose2d.1} parent=0 // loop_header_branch
    %12 = sbr.rel (%p10) target = $region8
  $region5: #{glu_conv_transpose2d.1} parent=0 // loop_body
    %s14 = ssub.s32 %s9, 1
    %s15 = ssub.s32 %s9, 2
    %s22 = sadd.s32 1, %s17
    %p23 = scmp.ge.s32.totalorder %s22, 1
    %s24 = scalar_select %p23, 0, %s22
    %s25 = sadd.s32 1, %s16
    %s26 = scalar_select %p23, %s25, %s16
    %p27 = scmp.ge.s32.totalorder %s26, 2
    %s28 = scalar_select %p27, 0, %s26
    %s29 = ssub.s32 %s16, %s28
    %s30 = ssub.s32 %s17, %s24
    %s31 = sor.u32 %s29, %s30
    %p32 = scmp.eq.s32.totalorder %s31, 0
    %s34 = sadd.s32 %s33, 1
    %s35 = scalar_select %p32, %s33, %s34
    %p38 = pneg %p32
    %p39 = scmp.eq.s32.totalorder %s9, 1
    %p40 = por %p38, %p39
    %p41 = scmp.ne.s32.totalorder %s33, %s36
    %p42 = scmp.eq.s32.totalorder %s9, 0
    %p43 = por %p41, %p42
    %p44 = scmp.ne.s32.totalorder %s33, %s36
    %p45 = scmp.eq.s32.totalorder %s14, 1
    %p46 = por %p44, %p45
    %p47 = scmp.ne.s32.totalorder %s36, %s37
    %p48 = scmp.eq.s32.totalorder %s14, 0
    %p49 = por %p47, %p48
    %p50 = scmp.ne.s32.totalorder %s36, %s37
    %p51 = scmp.eq.s32.totalorder %s15, 1
    %p52 = por %p50, %p51
    %p54 = scmp.ne.s32.totalorder %s37, %s53
    %p55 = scmp.eq.s32.totalorder %s15, 0
    %p56 = por %p54, %p55
    %s58 = sadd.s32 %s57, 1
    %p61 = scmp.eq.s32.totalorder %s9, 1
    %p62 = scmp.ne.s32.totalorder %s57, %s59
    %p63 = scmp.eq.s32.totalorder %s9, 0
    %p64 = por %p62, %p63
    %p65 = scmp.ne.s32.totalorder %s57, %s59
    %p66 = scmp.eq.s32.totalorder %s14, 1
    %p67 = por %p65, %p66
    %p68 = scmp.ne.s32.totalorder %s59, %s60
    %p69 = scmp.eq.s32.totalorder %s14, 0
    %p70 = por %p68, %p69
    %p71 = scmp.ne.s32.totalorder %s59, %s60
    %p72 = scmp.eq.s32.totalorder %s15, 1
    %p73 = por %p71, %p72
    %p75 = scmp.ne.s32.totalorder %s60, %s74
    %p76 = scmp.eq.s32.totalorder %s15, 0
    %p77 = por %p75, %p76
    %s79 = sadd.s32 %s78, 1
    %p82 = scmp.eq.s32.totalorder %s9, 1
    %p83 = scmp.ne.s32.totalorder %s78, %s80
    %p84 = scmp.eq.s32.totalorder %s9, 0
    %p85 = por %p83, %p84
    %p86 = scmp.ne.s32.totalorder %s78, %s80
    %p87 = scmp.eq.s32.totalorder %s14, 1
    %p88 = por %p86, %p87
    %p89 = scmp.ne.s32.totalorder %s80, %s81
    %p90 = scmp.eq.s32.totalorder %s14, 0
    %p91 = por %p89, %p90
    %p92 = scmp.ne.s32.totalorder %s80, %s81
    %p93 = scmp.eq.s32.totalorder %s15, 1
    %p94 = por %p92, %p93
    %p96 = scmp.ne.s32.totalorder %s81, %s95
    %p97 = scmp.eq.s32.totalorder %s15, 0
    %p98 = por %p96, %p97
    %s99 = ssub.s32 %s16, %s28
    %s100 = ssub.s32 %s17, %s24
    %s101 = sor.u32 %s99, %s100
    %p102 = scmp.eq.s32.totalorder %s101, 0
    %s104 = sadd.s32 %s103, 1
    %s105 = scalar_select %p102, %s103, %s104
    %p108 = pneg %p102
    %p109 = scmp.eq.s32.totalorder %s9, 1
    %p110 = por %p108, %p109
    %p111 = scmp.ne.s32.totalorder %s103, %s106
    %p112 = scmp.eq.s32.totalorder %s9, 0
    %p113 = por %p111, %p112
    %p114 = scmp.ne.s32.totalorder %s103, %s106
    %p115 = scmp.eq.s32.totalorder %s14, 1
    %p116 = por %p114, %p115
    %p117 = scmp.ne.s32.totalorder %s106, %s107
    %p118 = scmp.eq.s32.totalorder %s14, 0
    %p119 = por %p117, %p118
    %p120 = scmp.ne.s32.totalorder %s106, %s107
    %p121 = scmp.eq.s32.totalorder %s15, 1
    %p122 = por %p120, %p121
    %p124 = scmp.ne.s32.totalorder %s107, %s123
    %p125 = scmp.eq.s32.totalorder %s15, 0
    %p126 = por %p124, %p125
    %p127 = scmp.le.s32.totalorder 1, %s9
    %p128 = scmp.lt.s32.totalorder %s9, 3
    %p129 = pnand %p127, %p128
    %p130 = pneg %p129
    // Predicated region
    $region9: #{glu_conv_transpose2d.1} parent=5 // pred_check
      _
    $region10: #{glu_conv_transpose2d.1} parent=5 // pred_check_branch
      %132 = sbr.rel (%p129) target = $region12
    $region11: #{glu_conv_transpose2d.1} parent=5 // pred_region
      %s133 = ssub.s32 %s9, 1
      // Predicated region
      $region13: #{glu_conv_transpose2d.1} parent=11 // pred_check
        %p134 = pneg %p70
      $region14: #{glu_conv_transpose2d.1} parent=11 // pred_check_branch
        %136 = sbr.rel (%p134) target = $region16
      $region15: #{glu_conv_transpose2d.1} parent=11 // pred_region
        _
      $region16: #{glu_conv_transpose2d.1} parent=11 // pred_fallthru
        _
      // Predicated region
      $region17: #{glu_conv_transpose2d.1} parent=11 // pred_check
        %p137 = pneg %p91
      $region18: #{glu_conv_transpose2d.1} parent=11 // pred_check_branch
        %139 = sbr.rel (%p137) target = $region20
      $region19: #{glu_conv_transpose2d.1} parent=11 // pred_region
        _
      $region20: #{glu_conv_transpose2d.1} parent=11 // pred_fallthru
        _
    $region12: #{glu_conv_transpose2d.1} parent=5 // pred_fallthru
      _
    %p140 = scmp.lt.s32.totalorder %s9, 2
    // Predicated region
    $region21: #{glu_conv_transpose2d.1} parent=5 // pred_check
      %p141 = pneg %p140
    $region22: #{glu_conv_transpose2d.1} parent=5 // pred_check_branch
      %143 = sbr.rel (%p141) target = $region24
    $region23: #{glu_conv_transpose2d.1} parent=5 // pred_region
      // Predicated region
      $region25: #{glu_conv_transpose2d.1} parent=23 // pred_check
        %p144 = pneg %p43
      $region26: #{glu_conv_transpose2d.1} parent=23 // pred_check_branch
        %146 = sbr.rel (%p144) target = $region28
      $region27: #{glu_conv_transpose2d.1} parent=23 // pred_region
        %s147 = smul.u32 2, %s17
        %p148 = scmp.lt.s32.totalorder %s16, 1
        %s149 = scalar_select %p148, %s16, 1
        %p150 = scmp.lt.s32.totalorder %s147, 1
        %s151 = scalar_select %p150, %s147, 1
        %s152 = smul.addr %s149, 4
        %s153 = sadd.s32 %s151, %s152
        %s154 = smul.addr %s153, 4
        %s155 = scalar_lea.vmem %s0, %s154
        %s156 = smul.u32 2, %s17
      $region28: #{glu_conv_transpose2d.1} parent=23 // pred_fallthru
        _
    $region24: #{glu_conv_transpose2d.1} parent=5 // pred_fallthru
      _
    %p157 = scmp.le.s32.totalorder 1, %s9
    %p158 = scmp.lt.s32.totalorder %s9, 3
    %p159 = pnand %p157, %p158
    %p160 = pneg %p159
    // Predicated region
    $region29: #{glu_conv_transpose2d.1} parent=5 // pred_check
      _
    $region30: #{glu_conv_transpose2d.1} parent=5 // pred_check_branch
      %162 = sbr.rel (%p159) target = $region32
    $region31: #{glu_conv_transpose2d.1} parent=5 // pred_region
      %s163 = ssub.s32 %s9, 1
      %s164 = smul.u32 2, %s19
      %p165 = scmp.lt.s32.totalorder %s18, 1
      %s166 = scalar_select %p165, %s18, 1
      %p167 = scmp.lt.s32.totalorder %s164, 1
      %s168 = scalar_select %p167, %s164, 1
      %s169 = smul.addr %s166, 4
      %s170 = sadd.s32 %s168, %s169
      %s171 = smul.addr %s170, 4
      %s172 = scalar_lea.vmem %s0, %s171
      %p173 = pneg %p49
      %p174 = pneg %p46
      %p175 = pneg %p70
      %p176 = pneg %p67
      %p177 = pneg %p91
      %p178 = pneg %p88
      %p179 = pneg %p119
      %p180 = pneg %p116
      %s181 = smul.u32 2, %s19
      %p182 = scmp.lt.s32.totalorder %s18, 1
      %s183 = scalar_select %p182, %s18, 1
      %p184 = scmp.lt.s32.totalorder %s181, 1
      %s185 = scalar_select %p184, %s181, 1
      %s186 = smul.addr %s183, 8
      %s187 = sadd.s32 %s185, %s186
      %s188 = smul.addr %s187, 8
      %s189 = scalar_lea.vmem %s3, %s188
      %s190 = smul.u32 2, %s19
      %p191 = scmp.lt.s32.totalorder %s18, 1
      %s192 = scalar_select %p191, %s18, 1
      %p193 = scmp.lt.s32.totalorder %s190, 1
      %s194 = scalar_select %p193, %s190, 1
      %s195 = smul.addr %s192, 4
      %s196 = sadd.s32 %s194, %s195
      %s197 = smul.addr %s196, 4
      %s198 = scalar_lea.vmem %s0, %s197
      %s199 = smul.u32 2, %s19
      %s200 = smul.u32 2, %s19
      %p201 = scmp.lt.s32.totalorder %s18, 1
      %s202 = scalar_select %p201, %s18, 1
      %p203 = scmp.lt.s32.totalorder %s200, 1
      %s204 = scalar_select %p203, %s200, 1
      %s205 = smul.addr %s202, 8
      %s206 = sadd.s32 %s204, %s205
      %s207 = smul.addr %s206, 8
      %s208 = scalar_lea.vmem %s3, %s207
      %s209 = smul.u32 2, %s19
      %v211 = vld [vmem:[%s1] sm:$0xf]
      %v212 = vld [vmem:[%s1 + $0x4] sm:$0xf]
      %v213 = vld [vmem:[%s1 + $0x8] sm:$0xf]
      %v214 = vld [vmem:[%s1 + $0xc] sm:$0xf]
      %v215 = vld [vmem:[%s1 + $0x10] sm:$0xf]
      %v216 = vld [vmem:[%s1 + $0x14] sm:$0xf]
      %v217 = vld [vmem:[%s1 + $0x18] sm:$0xf]
      %v218 = vld [vmem:[%s1 + $0x1c] sm:$0xf]
      %v219 = vld [vmem:[%s198] sm:$0xff]
      %v220 = vld [vmem:[%s198 + $0x8] sm:$0xff]
      %v221 = vld [vmem:[%s2] sm:$0xff]
      %v222 = vld [vmem:[%s2 + $0x8] sm:$0xff]
      %v223 = vld [vmem:[%s2 + $0x10] sm:$0xff]
      %v224 = vld [vmem:[%s2 + $0x18] sm:$0xff]
      %v225 = vld [vmem:[%s2 + $0x20] sm:$0xff]
      %v226 = vld [vmem:[%s2 + $0x28] sm:$0xff]
      %v227 = vld [vmem:[%s2 + $0x30] sm:$0xff]
      %v228 = vld [vmem:[%s2 + $0x38] sm:$0xff]
      %230 = vset.pattern.permute.xlu0 0
      %231 = vperm.xlu0 %230, %v221
      %v232 = vpop.permute.xlu0 %231
      %235 = vset.pattern.permute.xlu0 0
      %236 = vperm.xlu0 %235, %v222
      %v237 = vpop.permute.xlu0 %236
      %240 = vset.pattern.permute.xlu0 0
      %241 = vperm.xlu0 %240, %v223
      %v242 = vpop.permute.xlu0 %241
      %245 = vset.pattern.permute.xlu0 0
      %246 = vperm.xlu0 %245, %v224
      %v247 = vpop.permute.xlu0 %246
      %250 = vset.pattern.permute.xlu0 0
      %251 = vperm.xlu0 %250, %v225
      %v252 = vpop.permute.xlu0 %251
      %255 = vset.pattern.permute.xlu0 0
      %256 = vperm.xlu0 %255, %v226
      %v257 = vpop.permute.xlu0 %256
      %260 = vset.pattern.permute.xlu0 0
      %261 = vperm.xlu0 %260, %v227
      %v262 = vpop.permute.xlu0 %261
      %265 = vset.pattern.permute.xlu0 0
      %266 = vperm.xlu0 %265, %v228
      %v267 = vpop.permute.xlu0 %266
      %v277 = vunpack.c.l.b16 %v211
      %v278 = vunpack.c.l.b16 %v212
      %v279 = vunpack.c.l.b16 %v213
      %v280 = vunpack.c.l.b16 %v214
      %v281 = vunpack.c.l.b16 %v215
      %v282 = vunpack.c.l.b16 %v216
      %v283 = vunpack.c.l.b16 %v217
      %v284 = vunpack.c.l.b16 %v218
      %v285 = vpack.c.b16 %v278, %v277
      %v286 = vpack.c.b16 %v280, %v279
      %v287 = vpack.c.b16 %v282, %v281
      %v288 = vpack.c.b16 %v284, %v283
      %v291 = vunpack.c.l.b16 %v219
      %v292 = vunpack.c.h.b16 %v219
      %v293 = vunpack.c.l.b16 %v220
      %v294 = vunpack.c.h.b16 %v220
      %v295 = vpack.c.b16 %v293, %v291
      %v296 = vpack.c.b16 %v294, %v292
      %vm299 = vcmask 130048
      %v301 = vsel %vm299, %v285, 0
      %v304 = vsel %vm299, %v286, 0
      %v307 = vsel %vm299, %v287, 0
      %v310 = vsel %vm299, %v288, 0
      %312 = vmatprep.subr.bf16.mxu0 %v296
      %313 = vmatpush1.bf16.msra.mxu0 %v295
      %314 = vmatprep.subr.bf16.mxu0 0
      %315 = vmatpush1.bf16.msra.mxu0 0
      %316 = vmatprep.subr.bf16.mxu0 0
      %317 = vmatpush1.bf16.msra.mxu0 0
      %318 = vmatprep.subr.bf16.mxu0 0
      %319 = vmatpush1.bf16.msra.mxu0 0
      %320 = vmatprep.subr.bf16.mxu0 0
      %321 = vmatpush1.bf16.msra.mxu0 0
      %322 = vmatprep.subr.bf16.mxu0 0
      %323 = vmatpush1.bf16.msra.mxu0 0
      %324 = vmatprep.subr.bf16.mxu0 0
      %325 = vmatpush1.bf16.msra.mxu0 0
      %326 = vmatprep.subr.bf16.mxu0 0
      %327 = vmatpush1.bf16.msra.mxu0 0
      %328 = vmatprep.subr.bf16.mxu0 0
      %329 = vmatpush1.bf16.msra.mxu0 0
      %330 = vmatprep.subr.bf16.mxu0 0
      %331 = vmatpush1.bf16.msra.mxu0 0
      %332 = vmatprep.subr.bf16.mxu0 0
      %333 = vmatpush1.bf16.msra.mxu0 0
      %334 = vmatprep.subr.bf16.mxu0 0
      %335 = vmatpush1.bf16.msra.mxu0 0
      %336 = vmatprep.subr.bf16.mxu0 0
      %337 = vmatpush1.bf16.msra.mxu0 0
      %338 = vmatprep.subr.bf16.mxu0 0
      %339 = vmatpush1.bf16.msra.mxu0 0
      %340 = vmatprep.subr.bf16.mxu0 0
      %341 = vmatpush1.bf16.msra.mxu0 0
      %342 = vmatprep.subr.bf16.mxu0 0
      %343 = vmatpush1.bf16.msra.mxu0 0
      %344 = vmatprep.mubr.bf16.mxu0 0
      %345 = vmatmul.mubr.bf16.gmra.mrb[0].mxu0 %v301
      %v346 = vpop.f32.mrb[0].mxu0
      %v347 = vadd.f32 %v232, %v346
      %v348 = vpop.f32.mrb[0].mxu0
      %v349 = vadd.f32 %v232, %v348
      %v350 = vpop.f32.mrb[0].mxu0
      %v351 = vadd.f32 %v237, %v350
      %v352 = vpop.f32.mrb[0].mxu0
      %v353 = vadd.f32 %v237, %v352
      %354 = vmatprep.mubr.bf16.mxu0 0
      %355 = vmatmul.mubr.bf16.gmra.mrb[0].mxu0 %v304
      %v356 = vpop.f32.mrb[0].mxu0
      %v357 = vadd.f32 %v242, %v356
      %v358 = vpop.f32.mrb[0].mxu0
      %v359 = vadd.f32 %v242, %v358
      %v360 = vpop.f32.mrb[0].mxu0
      %v361 = vadd.f32 %v247, %v360
      %v362 = vpop.f32.mrb[0].mxu0
      %v363 = vadd.f32 %v247, %v362
      %364 = vmatprep.mubr.bf16.mxu0 0
      %365 = vmatmul.mubr.bf16.gmra.mrb[0].mxu0 %v307
      %v366 = vpop.f32.mrb[0].mxu0
      %v367 = vadd.f32 %v252, %v366
      %v368 = vpop.f32.mrb[0].mxu0
      %v369 = vadd.f32 %v252, %v368
      %v370 = vpop.f32.mrb[0].mxu0
      %v371 = vadd.f32 %v257, %v370
      %v372 = vpop.f32.mrb[0].mxu0
      %v373 = vadd.f32 %v257, %v372
      %374 = vmatprep.mubr.bf16.mxu0 0
      %375 = vmatmul.mubr.bf16.gmra.mrb[0].mxu0 %v310
      %v376 = vpop.f32.mrb[0].mxu0
      %v377 = vadd.f32 %v262, %v376
      %v378 = vpop.f32.mrb[0].mxu0
      %v379 = vadd.f32 %v262, %v378
      %v380 = vpop.f32.mrb[0].mxu0
      %v381 = vadd.f32 %v267, %v380
      %v382 = vpop.f32.mrb[0].mxu0
      %v383 = vadd.f32 %v267, %v382
      %384 = vdwg.mxu0
      %v385 = vxor.u32 %v367, 2147483648
      %v386 = vxor.u32 %v369, 2147483648
      %v387 = vxor.u32 %v371, 2147483648
      %v388 = vxor.u32 %v373, 2147483648
      %v389 = vxor.u32 %v377, 2147483648
      %v390 = vxor.u32 %v379, 2147483648
      %v391 = vxor.u32 %v381, 2147483648
      %v392 = vxor.u32 %v383, 2147483648
      %v393 = vmul.f32 %v385, 1.442695
      %v394 = vpow.pop %v393
      %v395 = vmul.f32 %v386, 1.442695
      %v396 = vpow.pop %v395
      %v397 = vmul.f32 %v387, 1.442695
      %v398 = vpow.pop %v397
      %v399 = vmul.f32 %v388, 1.442695
      %v400 = vpow.pop %v399
      %v401 = vmul.f32 %v389, 1.442695
      %v402 = vpow.pop %v401
      %v403 = vmul.f32 %v390, 1.442695
      %v404 = vpow.pop %v403
      %v405 = vmul.f32 %v391, 1.442695
      %v406 = vpow.pop %v405
      %v407 = vmul.f32 %v392, 1.442695
      %v408 = vpow.pop %v407
      %v409 = vadd.f32 %v394, 1.0
      %v410 = vadd.f32 %v396, 1.0
      %v411 = vadd.f32 %v398, 1.0
      %v412 = vadd.f32 %v400, 1.0
      %v413 = vadd.f32 %v402, 1.0
      %v414 = vadd.f32 %v404, 1.0
      %v415 = vadd.f32 %v406, 1.0
      %v416 = vadd.f32 %v408, 1.0
      %v417 = vrcp.pop %v409
      %v418 = vmul.f32 1.0, %v417
      %v419 = vrcp.pop %v410
      %v420 = vmul.f32 1.0, %v419
      %v421 = vrcp.pop %v411
      %v422 = vmul.f32 1.0, %v421
      %v423 = vrcp.pop %v412
      %v424 = vmul.f32 1.0, %v423
      %v425 = vrcp.pop %v413
      %v426 = vmul.f32 1.0, %v425
      %v427 = vrcp.pop %v414
      %v428 = vmul.f32 1.0, %v427
      %v429 = vrcp.pop %v415
      %v430 = vmul.f32 1.0, %v429
      %v431 = vrcp.pop %v416
      %v432 = vmul.f32 1.0, %v431
      %v433 = vmul.f32 %v347, %v418
      %v434 = vmul.f32 %v349, %v420
      %v435 = vmul.f32 %v351, %v422
      %v436 = vmul.f32 %v353, %v424
      %v437 = vmul.f32 %v357, %v426
      %v438 = vmul.f32 %v359, %v428
      %v439 = vmul.f32 %v361, %v430
      %v440 = vmul.f32 %v363, %v432
      %441 = vst [vmem:[%s208] sm:$0xff] %v433
      %442 = vst [vmem:[%s208 + $0x8] sm:$0xff] %v434
      %443 = vst [vmem:[%s208 + $0x10] sm:$0xff] %v435
      %444 = vst [vmem:[%s208 + $0x18] sm:$0xff] %v436
      %445 = vst [vmem:[%s208 + $0x20] sm:$0xff] %v437
      %446 = vst [vmem:[%s208 + $0x28] sm:$0xff] %v438
      %447 = vst [vmem:[%s208 + $0x30] sm:$0xff] %v439
      %448 = vst [vmem:[%s208 + $0x38] sm:$0xff] %v440
      %s449 = smul.u32 2, %s19
      %p450 = scmp.lt.s32.totalorder %s18, 1
      %s451 = scalar_select %p450, %s18, 1
      %p452 = scmp.lt.s32.totalorder %s449, 1
      %s453 = scalar_select %p452, %s449, 1
      %s454 = smul.addr %s451, 8
      %s455 = sadd.s32 %s453, %s454
      %s456 = smul.addr %s455, 8
      %s457 = scalar_lea.vmem %s3, %s456
      // Predicated region
      $region33: #{glu_conv_transpose2d.1} parent=31 // pred_check
        %p458 = pneg %p116
      $region34: #{glu_conv_transpose2d.1} parent=31 // pred_check_branch
        %460 = sbr.rel (%p458) target = $region36
      $region35: #{glu_conv_transpose2d.1} parent=31 // pred_region
        %s461 = smul.u32 2, %s19
      $region36: #{glu_conv_transpose2d.1} parent=31 // pred_fallthru
        _
    $region32: #{glu_conv_transpose2d.1} parent=5 // pred_fallthru
      _
    %p462 = scmp.le.s32.totalorder 2, %s9
    // Predicated region
    $region37: #{glu_conv_transpose2d.1} parent=5 // pred_check
      %p463 = pneg %p462
    $region38: #{glu_conv_transpose2d.1} parent=5 // pred_check_branch
      %465 = sbr.rel (%p463) target = $region40
    $region39: #{glu_conv_transpose2d.1} parent=5 // pred_region
      %s466 = ssub.s32 %s9, 2
      // Predicated region
      $region41: #{glu_conv_transpose2d.1} parent=39 // pred_check
        %p467 = pneg %p122
      $region42: #{glu_conv_transpose2d.1} parent=39 // pred_check_branch
        %469 = sbr.rel (%p467) target = $region44
      $region43: #{glu_conv_transpose2d.1} parent=39 // pred_region
        %s470 = smul.u32 2, %s21
        %p471 = scmp.lt.s32.totalorder %s20, 1
        %s472 = scalar_select %p471, %s20, 1
        %p473 = scmp.lt.s32.totalorder %s470, 1
        %s474 = scalar_select %p473, %s470, 1
        %s475 = smul.addr %s472, 8
        %s476 = sadd.s32 %s474, %s475
        %s477 = smul.addr %s476, 8
        %s478 = scalar_lea.vmem %s3, %s477
      $region44: #{glu_conv_transpose2d.1} parent=39 // pred_fallthru
        _
    $region40: #{glu_conv_transpose2d.1} parent=5 // pred_fallthru
      _
  $region6: #{glu_conv_transpose2d.1} parent=0 // loop_footer
    %s13 = sadd.s32 1, %s9
  $region7: #{glu_conv_transpose2d.1} parent=0 // loop_footer_branch
    %8 = sbr.rel target = $region3
  $region8: #{glu_conv_transpose2d.1} parent=0 // loop_exit
    _

</llo_original>
